<compile_context>
chip_gen: v5e
topology: v5e:2x2
jax: 0.10.0
libtpu: 0.0.40
codegen_flags: <defaults>
</compile_context>

<pallas_src>
import jax
import jax.numpy as jnp
from jax.experimental import pallas as pl
from jax.experimental.pallas import tpu as pltpu


def _round_up(x, m):
    return (x + m - 1) // m * m


def _gather_vmem_kernel(idx_ref, table_ref, out_ref):
    # idx_ref   : (N_pad,) int32 token ids in SMEM (scalar-prefetched).
    # table_ref : (V, E) embedding table, VMEM resident (same block index on
    #             every grid step -> DMA'd from HBM exactly once).
    # out_ref   : (T, E) output token block in VMEM.
    T = out_ref.shape[0]
    base = pl.program_id(0) * T

    @pl.loop(0, T)
    def _(t):
        row = idx_ref[base + t]
        out_ref[pl.ds(t, 1), :] = table_ref[pl.ds(row, 1), :]
    # Dropout(p=0.0) (module default / eval) is the identity.
    # TODO(synk): for drop_out > 0.0 in training mode, add pltpu.prng_seed
    # (seeded per block with pl.program_id) + pltpu.prng_random_bits mask.


def _gather_dma_kernel(idx_ref, table_hbm, out_ref, sem):
    # idx_ref   : (N_pad,) int32 token ids in SMEM (scalar-prefetched).
    # table_hbm : (V, E) embedding table left in HBM (memory_space=pl.ANY).
    # out_ref   : (T, E) output token block in VMEM (DMA destination).
    # sem       : (K,) DMA semaphores -> K outstanding row copies in flight.
    T = out_ref.shape[0]
    K = sem.shape[0]
    base = pl.program_id(0) * T

    def row_copy(t):
        row = idx_ref[base + t]
        return pltpu.make_async_copy(
            table_hbm.at[pl.ds(row, 1), :],
            out_ref.at[pl.ds(t, 1), :],
            sem.at[t % K],
        )

    # Prime K outstanding row DMAs (wrapper guarantees T >= K).
    @pl.loop(0, K)
    def _(t):
        row_copy(t).start()

    # Rolling wait/issue: keep K copies in flight, drain all before body ends
    # so the pipelined output writeback sees complete data.
    @pl.loop(0, T)
    def _(t):
        row_copy(t).wait()

        @pl.when(t + K < T)
        def _():
            row_copy(t + K).start()
    # Dropout(p=0.0) is the identity (see TODO above).


def embedding_layer(indices, emb_table, *, block_tokens=256,
                    vmem_table_bytes_limit=8 * 1024 * 1024):
    """indices: [B, S] int; emb_table: [V, E] float32 -> [B, S, E] float32."""
    B, S = indices.shape
    V, E = emb_table.shape
    N = B * S

    # Clamp ids to the valid range (PyTorch raises on OOB ids; a raw gather
    # would silently read an arbitrary row).
    idx_flat = jnp.clip(indices.reshape(N).astype(jnp.int32), 0, V - 1)

    # Token-block size: multiple of 8 (dense sublane stores / unmasked
    # writeback), capped so each double-buffered (T, E) output block stays
    # <= ~4 MiB (safe under the v7x 32 MiB scoped-VMEM default as well as
    # v5e/v6e), and never larger than the (8-rounded) token count.
    max_t_for_vmem = max(8, (4 * 1024 * 1024 // (E * 4)) // 8 * 8)
    T = min(block_tokens, max_t_for_vmem, _round_up(N, 8))
    T = max(8, (T // 8) * 8)

    N_pad = _round_up(N, T)
    if N_pad != N:
        idx_flat = jnp.pad(idx_flat, (0, N_pad - N))  # pad with valid row 0

    grid = (N_pad // T,)
    table_bytes = V * E * 4
    cost = pl.CostEstimate(
        flops=0,
        transcendentals=0,
        bytes_accessed=2 * N_pad * E * 4 + table_bytes,
    )
    cparams = pltpu.CompilerParams(dimension_semantics=("parallel",))

    if table_bytes <= vmem_table_bytes_limit:
        # Fast path: table DMA'd to VMEM once, in-VMEM row gather per block.
        out = pl.pallas_call(
            _gather_vmem_kernel,
            out_shape=jax.ShapeDtypeStruct((N_pad, E), emb_table.dtype),
            grid_spec=pltpu.PrefetchScalarGridSpec(
                num_scalar_prefetch=1,
                grid=grid,
                in_specs=[
                    # Same block index every step -> fetched once, reused.
                    pl.BlockSpec((V, E), lambda b, idx: (0, 0)),
                ],
                out_specs=pl.BlockSpec((T, E), lambda b, idx: (b, 0)),
            ),
            compiler_params=cparams,
            cost_estimate=cost,
        )(idx_flat, emb_table)
    else:
        # Big-table path: table stays in HBM; K outstanding row DMAs per
        # block land directly in the output VMEM block.
        K = 8
        out = pl.pallas_call(
            _gather_dma_kernel,
            out_shape=jax.ShapeDtypeStruct((N_pad, E), emb_table.dtype),
            grid_spec=pltpu.PrefetchScalarGridSpec(
                num_scalar_prefetch=1,
                grid=grid,
                in_specs=[pl.BlockSpec(memory_space=pl.ANY)],
                out_specs=pl.BlockSpec((T, E), lambda b, idx: (b, 0)),
                scratch_shapes=[pltpu.SemaphoreType.DMA((K,))],
            ),
            compiler_params=cparams,
            cost_estimate=cost,
        )(idx_flat, emb_table)

    return out[:N].reshape(B, S, E)


if __name__ == "__main__":
    # Small, forward-consistent shapes.
    B, S = 2, 8            # batch, sequence length of token ids
    V, E = 32, 128         # vocab_size, embedding_size

    key = jax.random.PRNGKey(0)
    k_w, k_idx = jax.random.split(key)

    # Deterministic xavier_normal_ init: std = sqrt(2 / (V + E)).
    std = (2.0 / (V + E)) ** 0.5
    emb_table = jax.random.normal(k_w, (V, E), dtype=jnp.float32) * std
    indices = jax.random.randint(k_idx, (B, S), 0, V, dtype=jnp.int32)

    ref = jnp.take(emb_table, indices, axis=0)

    # Fast path: VMEM-resident table + in-VMEM gather.
    out_fast = jax.block_until_ready(embedding_layer(indices, emb_table))
    assert out_fast.shape == (B, S, E)
    assert jnp.allclose(out_fast, ref, atol=1e-6), "fast path mismatch"

    # Large-table path (forced): HBM table + outstanding row DMAs into the
    # output block.
    out_dma = jax.block_until_ready(
        embedding_layer(indices, emb_table, vmem_table_bytes_limit=0))
    assert out_dma.shape == (B, S, E)
    assert jnp.allclose(out_dma, ref, atol=1e-6), "DMA path mismatch"

    # Ragged token count (N = 15, padded up to one 16-token block), both paths.
    B2, S2 = 3, 5
    idx2 = jax.random.randint(jax.random.PRNGKey(1), (B2, S2), 0, V,
                              dtype=jnp.int32)
    ref2 = jnp.take(emb_table, idx2, axis=0)
    out2a = jax.block_until_ready(embedding_layer(idx2, emb_table))
    out2b = jax.block_until_ready(
        embedding_layer(idx2, emb_table, vmem_table_bytes_limit=0))
    assert jnp.allclose(out2a, ref2, atol=1e-6), "fast path (ragged) mismatch"
    assert jnp.allclose(out2b, ref2, atol=1e-6), "DMA path (ragged) mismatch"

    print("KERNEL_OK")
</pallas_src>

<mosaic_0001>
module attributes {stable_mosaic.version = 11 : i64} {
  func.func @_gather_vmem_kernel(%arg0: i32, %arg1: memref<16xi32, #tpu.memory_space<smem>>, %arg2: memref<32x128xf32, #tpu.memory_space<vmem>>, %arg3: memref<16x128xf32, #tpu.memory_space<vmem>>) attributes {dimension_semantics = [#tpu.dimension_semantics<parallel>], iteration_bounds = array<i64: 1>, scalar_prefetch = 1 : i64, scratch_operands = 0 : i64, tpu.core_type = #tpu.core_type<tc>, window_params = [{pipeline_mode = #tpu.pipeline_mode<synchronous>, transform_indices = @transform_0, window_bounds = array<i64: 32, 128>}, {transform_indices = @transform_1, window_bounds = array<i64: 16, 128>}]} {
    %c16_i32 = arith.constant 16 : i32
    %0 = arith.muli %arg0, %c16_i32 : i32
    %c0_i32 = arith.constant 0 : i32
    %c16_i32_0 = arith.constant 16 : i32
    %1 = arith.addi %c0_i32, %c16_i32_0 : i32
    %c1_i32 = arith.constant 1 : i32
    scf.for %arg4 = %c0_i32 to %1 step %c1_i32  : i32 {
      %c1_i32_2 = arith.constant 1 : i32
      %2 = arith.muli %arg4, %c1_i32_2 : i32
      %c0_i32_3 = arith.constant 0 : i32
      %3 = arith.addi %c0_i32_3, %2 : i32
      %4 = arith.addi %0, %3 : i32
      %5 = arith.index_cast %4 : i32 to index
      %6 = memref.load %arg1[%5] : memref<16xi32, #tpu.memory_space<smem>>
      %7 = arith.index_cast %6 : i32 to index
      %c0 = arith.constant 0 : index
      %8 = vector.load %arg2[%7, %c0] : memref<32x128xf32, #tpu.memory_space<vmem>>, vector<1x128xf32>
      %9 = arith.index_cast %3 : i32 to index
      %c0_4 = arith.constant 0 : index
      %10 = vector.load %arg3[%9, %c0_4] : memref<16x128xf32, #tpu.memory_space<vmem>>, vector<1x128xf32>
      tpu.vector_store %arg3[%9, %c0_4], %8 {strides = array<i32>} : memref<16x128xf32, #tpu.memory_space<vmem>>, vector<1x128xf32>,
    }
    %c16_i32_1 = arith.constant 16 : i32
    return
  }
  func.func @transform_0(%arg0: i32, %arg1: memref<16xi32, #tpu.memory_space<smem>>) -> (i32, i32) {
    %c0_i32 = arith.constant 0 : i32
    %c0_i32_0 = arith.constant 0 : i32
    %c0_i32_1 = arith.constant 0 : i32
    return %c0_i32, %c0_i32_0 : i32, i32
  }
  func.func @transform_1(%arg0: i32, %arg1: memref<16xi32, #tpu.memory_space<smem>>) -> (i32, i32) {
    %c0_i32 = arith.constant 0 : i32
    %c0_i32_0 = arith.constant 0 : i32
    return %arg0, %c0_i32 : i32, i32
  }
}

</mosaic_0001>

<llo_original>
// kernel: tpu_custom_call.1
$region0: #{tpu_custom_call.1}
  #allocation0 [shape = 'u32[]', space=smem, size = 0x4, offset = 0x4, fixed_abs, tag = 'smem constant byte address 0x4 - core index']
  #allocation1 [shape = 'u32[72,128]{1,0:T(1,128)}', space=vmem, size = 0x9000, scoped, tag = 'internal scratch']
  #allocation2 [shape = 's32[1]{0}', space=sflag, size = 0x4, scoped, tag = 'scoped memory for tpu_custom_call.1']
  #allocation3 [shape = 'u8[512]{0}', space=smem, size = 0x200, scoped, tag = 'prefetched SMEM operand 0']
  %s0 = inlined_call_operand.hbm [shape: s32[16], index: 0, kind: input, shape index: {}]
  %s1 = inlined_call_operand.hbm [shape: f32[32,128], index: 1, kind: input, shape index: {}]
  %s2 = inlined_call_operand.hbm [shape: f32[16,128], index: 2, kind: output, shape index: {}]
  %s3 = sld [smem:[#allocation0]]
  $region25: #{tpu_custom_call.1} parent=0
    _
  %s5 = ssub.s32 1, %s3
  %s6 = scalar_select 0, %s5, %s3
  %s8 = sshll.u32 %s0, 4
  %s9 = int_to_ptr.hbm [resolvable:$true] %s8
  %11 = dma.hbm_to_smem %s9, 16, [#allocation3], [#allocation2]
  %13 = dma.done [#allocation2], 16
  %14 = sfence
  $region1: #{tpu_custom_call.1} parent=0
    #allocation4 [shape = 'u8[16384]{0}', space=vmem, size = 0x4000, scoped, tag = 'input window, operand 1, single buffered']
    #allocation5 [shape = 's32[1]{0}', space=sflag, size = 0x4, scoped, tag = 'scoped memory for tpu_custom_call.1']
    #allocation6 [shape = 's32[1]{0}', space=sflag, size = 0x4, scoped, tag = 'scoped memory for tpu_custom_call.1']
    #allocation7 [shape = 'u8[8192]{0}', space=vmem, size = 0x2000, scoped, tag = 'output window, operand 0, single buffered']
    %15 = vsyncpa [#allocation5], 0
    %16 = vsyncpa [#allocation6], 0
    // Predicated region
    $region2: #{tpu_custom_call.1} parent=1 // pred_check
      _
    $region3: #{tpu_custom_call.1} parent=1 // pred_check_branch
      %18 = sbr.rel (0) target = $region5
    $region4: #{tpu_custom_call.1} parent=1 // pred_region
      %20 = vsyncadd [#allocation5], 0
      %s21 = sshll.u32 %s1, 4
      %s22 = int_to_ptr.hbm [resolvable:$true] %s21
      %s23 = sshll.u32 [#allocation4], 4
      %s24 = int_to_ptr.vmem [resolvable:$true] %s23
      %29 = dma.hbm_to_vmem [thread:$0]  %s22, 512, %s24, [#allocation5], 128, 128, 8
    $region5: #{tpu_custom_call.1} parent=1 // pred_fallthru
      _
    // Predicated region
    $region6: #{tpu_custom_call.1} parent=1 // pred_check
      _
    $region7: #{tpu_custom_call.1} parent=1 // pred_check_branch
      %31 = sbr.rel (0) target = $region9
    $region8: #{tpu_custom_call.1} parent=1 // pred_region
      %33 = dma.done [#allocation5], 512
    $region9: #{tpu_custom_call.1} parent=1 // pred_fallthru
      _
    %s34 = smul.u32 0, 16
    loop: start=0, step=1, limit=16
    $region10: #{tpu_custom_call.1} parent=1 // loop_pre_header
      _
    $region11: #{tpu_custom_call.1} parent=1 // loop_header
      %s36 = sphi 0, %s40
      %p37 = scmp.ge.s32.totalorder %s36, 16
    $region12: #{tpu_custom_call.1} parent=1 // loop_header_branch
      %39 = sbr.rel (%p37) target = $region16
    $region13: #{tpu_custom_call.1} parent=1 // loop_body
      %s41 = sadd.s32 %s34, %s36
      %s42 = sld [smem:[#allocation3 + %s41]]
      %s43 = scalar_lea.vmem [#allocation4], %s42
      %v44 = vld [vmem:[%s43] sm:$0x1]
      %s45 = scalar_lea.vmem [#allocation7], %s36
      %46 = vst [vmem:[%s45] sm:$0x1] %v44
    $region14: #{tpu_custom_call.1} parent=1 // loop_footer
      %s40 = sadd.s32 1, %s36
    $region15: #{tpu_custom_call.1} parent=1 // loop_footer_branch
      %35 = sbr.rel target = $region11
    $region16: #{tpu_custom_call.1} parent=1 // loop_exit
      _
    // Predicated region
    $region17: #{tpu_custom_call.1} parent=1 // pred_check
      _
    $region18: #{tpu_custom_call.1} parent=1 // pred_check_branch
      %48 = sbr.rel (0) target = $region20
    $region19: #{tpu_custom_call.1} parent=1 // pred_region
      %50 = vsyncadd [#allocation6], 0
      %s51 = sshll.u32 [#allocation7], 4
      %s52 = int_to_ptr.vmem [resolvable:$true] %s51
      %s53 = sshll.u32 %s2, 4
      %s54 = int_to_ptr.hbm [resolvable:$true] %s53
      %59 = dma.vmem_to_hbm [thread:$0]  %s52, 256, %s54, [#allocation6], 128, 128, 8
    $region20: #{tpu_custom_call.1} parent=1 // pred_fallthru
      _
    // Predicated region
    $region21: #{tpu_custom_call.1} parent=1 // pred_check
      _
    $region22: #{tpu_custom_call.1} parent=1 // pred_check_branch
      %61 = sbr.rel (0) target = $region24
    $region23: #{tpu_custom_call.1} parent=1 // pred_region
      %63 = dma.done [#allocation6], 256
    $region24: #{tpu_custom_call.1} parent=1 // pred_fallthru
      _
    %64 = vsyncpa [#allocation5], 1
    %65 = vsyncpa [#allocation6], 1

</llo_original>
